<compile_context>
chip_gen: v7x
topology: tpu7x:2x2x1
jax: 0.10.0
libtpu: 0.0.40
codegen_flags: <defaults>
</compile_context>

<pallas_src>
import functools

import jax
import jax.numpy as jnp
import numpy as np
from jax import lax
from jax.experimental import pallas as pl
from jax.experimental.pallas import tpu as pltpu


_BLOCK_BYTES_CAP = 8 * 1024 * 1024      # upper bound on one x (and out) block


def _vmem_capacity_bytes() -> int:
    """Per-core VMEM capacity; conservative 64 MiB (v7x) if the query fails."""
    try:
        return int(pltpu.get_tpu_info().vmem_capacity_bytes)
    except Exception:
        return 64 * 1024 * 1024


def _choose_tiles(B, R, C, itemsize, target_block_bytes, sublane):
    """Pick (tB, tR) so one x/out block is ~target_block_bytes and layout-legal."""
    row_bytes = C * itemsize

    if R <= sublane:
        tR = R                                      # full dim: always legal
    else:
        rows_cap = max(sublane, target_block_bytes // row_bytes)
        tR = min(R, rows_cap)                       # no artificial row clamp
        tR = max(sublane, (tR // sublane) * sublane)

    tB = max(1, min(B, target_block_bytes // (tR * row_bytes)))

    # v7x has 2 TensorCores: if a mid-size input would collapse to a single
    # grid step, split once along the (parallel) row/batch axis.
    total_bytes = B * R * row_bytes
    if pl.cdiv(R, tR) * pl.cdiv(B, tB) == 1 and total_bytes >= (2 << 20):
        if R > sublane:
            tR = pl.cdiv(pl.cdiv(R, 2), sublane) * sublane
        elif B >= 2:
            tB = pl.cdiv(B, 2)

    return int(tB), int(tR)


def _fused_pos_kernel(x_ref, o_ref, *, tile_rows, lane, log2_e):
    """out = x + (2*pos - 1) with pos generated on-the-fly.

    x_ref/o_ref: (tB, tile_rows, lane).  For the lane-dense (R, 128) view the
    within-batch flat index of element (row, col) is row*lane + col, and since
    E = 2**log2_e:  n = flat >> log2_e, bit = flat & (E-1).
    The extra VPU bit-ops are free filler: the kernel is HBM-bandwidth bound.
    """
    r = pl.program_id(0)
    row = lax.broadcasted_iota(jnp.int32, (tile_rows, lane), 0) + r * tile_rows
    col = lax.broadcasted_iota(jnp.int32, (tile_rows, lane), 1)
    flat = row * lane + col
    n = jnp.right_shift(flat, log2_e)
    bit = flat & ((1 << log2_e) - 1)
    # Shift clamp: for bit >= 31 the reference value is 0 (n < 2**31), and
    # (n >> 31) & 1 == 0 there as well, so the clamp preserves semantics.
    bitval = jnp.right_shift(n, jnp.minimum(bit, 31)) & 1
    pos = (2 * bitval - 1).astype(o_ref.dtype)
    o_ref[...] = x_ref[...] + pos[None, :, :]


def _add_pos_kernel(x_ref, pos_ref, o_ref):
    # pos_ref has a leading size-1 dim -> broadcast over the batch tile.
    o_ref[...] = x_ref[...] + pos_ref[...]


@jax.jit
def binary_positional_encoding(x: jax.Array) -> jax.Array:
    """x: (B, S, E) -> x + (2 * binary_pos(S, E) - 1), broadcast over batch."""
    B, S, E = x.shape
    assert S * E < 2 ** 31, "flat positional index must fit in int32"

    itemsize = jnp.dtype(x.dtype).itemsize
    sublane = max(8, 32 // max(1, itemsize))        # 8 f32 / 16 bf16 / 32 int8
    vmem_cap = _vmem_capacity_bytes()

    lane_dense = (S * E) % 128 == 0
    pow2_e = E > 0 and (E & (E - 1)) == 0
    fused = lane_dense and pow2_e                   # generate pos in-kernel

    if lane_dense:
        R, C = (S * E) // 128, 128
    else:
        # NOTE: lane-sparse fallback (last dim E < 128 -> masked stores); only
        # reached when S*E is not a multiple of 128.
        R, C = S, E

    # Gate the block size on per-core VMEM so v7x (64 MiB) is never squeezed:
    # per-step footprint is 2 buffers x (x + out [+ pos]) blocks.
    divisor = 8 if fused else 12
    target = max(1 << 20, min(_BLOCK_BYTES_CAP, vmem_cap // divisor))
    tB, tR = _choose_tiles(B, R, C, itemsize, target, sublane)

    x_block = tB * tR * C * itemsize
    pos_block = 0 if fused else tR * C * itemsize
    footprint = 2 * (2 * x_block + pos_block)       # double-buffered
    vmem_limit = int(min(vmem_cap * 3 // 4,
                         max(32 << 20, footprint + (8 << 20))))

    xv = x.reshape(B, R, C)
    grid = (pl.cdiv(R, tR), pl.cdiv(B, tB))         # batch innermost
    compiler_params = pltpu.CompilerParams(
        dimension_semantics=("parallel", "parallel"),
        vmem_limit_bytes=vmem_limit,
    )
    x_spec = pl.BlockSpec((tB, tR, C), lambda r, b: (b, r, 0))
    out_spec = pl.BlockSpec((tB, tR, C), lambda r, b: (b, r, 0))
    out_shape = jax.ShapeDtypeStruct((B, R, C), x.dtype)

    if fused:
        kernel = functools.partial(
            _fused_pos_kernel, tile_rows=tR, lane=C, log2_e=E.bit_length() - 1)
        out = pl.pallas_call(
            kernel,
            out_shape=out_shape,
            grid_spec=pltpu.PrefetchScalarGridSpec(
                num_scalar_prefetch=0, grid=grid,
                in_specs=[x_spec], out_specs=out_spec),
            compiler_params=compiler_params,
        )(xv)
    else:
        # Build the +-1 table once in the wrapper (tiny), cast to x.dtype so
        # the in-kernel add/store stay in the activation dtype.
        n = jnp.arange(S, dtype=jnp.int32)[:, None]
        bit = jnp.arange(E, dtype=jnp.int32)[None, :]
        bits = jnp.right_shift(n, jnp.minimum(bit, 31)) & 1   # bit>=31 -> 0
        pos = (2 * bits - 1).astype(x.dtype).reshape(1, R, C)
        out = pl.pallas_call(
            _add_pos_kernel,
            out_shape=out_shape,
            grid_spec=pltpu.PrefetchScalarGridSpec(
                num_scalar_prefetch=0, grid=grid,
                in_specs=[
                    x_spec,
                    # Constant block index along the inner batch axis -> the
                    # pos tile stays resident in VMEM across batch steps.
                    pl.BlockSpec((1, tR, C), lambda r, b: (0, r, 0)),
                ],
                out_specs=out_spec),
            compiler_params=compiler_params,
        )(xv, pos)

    return out.reshape(B, S, E)


def _reference(x_np, S, E):
    pos_np = np.array(
        [[(nn & (1 << b)) >> b for b in range(E)] for nn in range(S)],
        dtype=x_np.dtype,
    )
    return x_np + (2.0 * pos_np - 1.0)[None, :, :]


if __name__ == "__main__":
    # Small shapes consistent with the module's forward: (batch, seq, emb).
    B, S, E = 2, 8, 32
    key = jax.random.PRNGKey(0)
    x = jax.random.normal(key, (B, S, E), dtype=jnp.float32)

    out = jax.block_until_ready(binary_positional_encoding(x))
    assert out.shape == (B, S, E)
    ref = _reference(np.asarray(x), S, E)
    assert np.allclose(np.asarray(out), ref, atol=1e-6, rtol=1e-6), \
        "mismatch vs reference (fused pos path)"

    # Also exercise the resident-pos-input path (E not a power of two,
    # S*E still a multiple of 128).
    B2, S2, E2 = 2, 16, 24
    x2 = jax.random.normal(jax.random.PRNGKey(0), (B2, S2, E2), dtype=jnp.float32)
    out2 = jax.block_until_ready(binary_positional_encoding(x2))
    ref2 = _reference(np.asarray(x2), S2, E2)
    assert np.allclose(np.asarray(out2), ref2, atol=1e-6, rtol=1e-6), \
        "mismatch vs reference (pos-input path)"

    print("KERNEL_OK")
</pallas_src>

<mosaic_0001>
module attributes {stable_mosaic.version = 11 : i64} {
  func.func @_fused_pos_kernel(%arg0: i32, %arg1: i32, %arg2: memref<2x2x128xf32, #tpu.memory_space<vmem>>, %arg3: memref<2x2x128xf32, #tpu.memory_space<vmem>>) attributes {dimension_semantics = [#tpu.dimension_semantics<parallel>, #tpu.dimension_semantics<parallel>], iteration_bounds = array<i64: 1, 1>, scalar_prefetch = 0 : i64, scratch_operands = 0 : i64, tpu.core_type = #tpu.core_type<tc>, window_params = [{transform_indices = @transform_0, window_bounds = array<i64: 2, 2, 128>}, {transform_indices = @transform_1, window_bounds = array<i64: 2, 2, 128>}]} {
    %0 = tpu.iota {dimensions = array<i32: 0>} : vector<2x128xi32>
    %c2_i32 = arith.constant 2 : i32
    %1 = arith.muli %arg0, %c2_i32 : i32
    %2 = vector.broadcast %1 : i32 to vector<2x128xi32>
    %3 = arith.addi %0, %2 : vector<2x128xi32>
    %4 = tpu.iota {dimensions = array<i32: 1>} : vector<2x128xi32>
    %c128_i32 = arith.constant 128 : i32
    %5 = vector.broadcast %c128_i32 : i32 to vector<2x128xi32>
    %6 = arith.muli %3, %5 : vector<2x128xi32>
    %7 = arith.addi %6, %4 : vector<2x128xi32>
    %c5_i32 = arith.constant 5 : i32
    %8 = vector.broadcast %c5_i32 : i32 to vector<2x128xi32>
    %9 = arith.shrsi %7, %8 : vector<2x128xi32>
    %c31_i32 = arith.constant 31 : i32
    %10 = vector.broadcast %c31_i32 : i32 to vector<2x128xi32>
    %11 = arith.andi %7, %10 : vector<2x128xi32>
    %c31_i32_0 = arith.constant 31 : i32
    %12 = vector.broadcast %c31_i32_0 : i32 to vector<2x128xi32>
    %13 = arith.minsi %11, %12 : vector<2x128xi32>
    %14 = arith.shrsi %9, %13 : vector<2x128xi32>
    %c1_i32 = arith.constant 1 : i32
    %15 = vector.broadcast %c1_i32 : i32 to vector<2x128xi32>
    %16 = arith.andi %14, %15 : vector<2x128xi32>
    %c2_i32_1 = arith.constant 2 : i32
    %17 = vector.broadcast %c2_i32_1 : i32 to vector<2x128xi32>
    %18 = arith.muli %17, %16 : vector<2x128xi32>
    %c1_i32_2 = arith.constant 1 : i32
    %19 = vector.broadcast %c1_i32_2 : i32 to vector<2x128xi32>
    %20 = arith.subi %18, %19 : vector<2x128xi32>
    %21 = arith.sitofp %20 : vector<2x128xi32> to vector<2x128xf32>
    %c0 = arith.constant 0 : index
    %c0_3 = arith.constant 0 : index
    %c0_4 = arith.constant 0 : index
    %22 = vector.load %arg2[%c0, %c0_3, %c0_4] : memref<2x2x128xf32, #tpu.memory_space<vmem>>, vector<2x2x128xf32>
    %23 = vector.shape_cast %21 : vector<2x128xf32> to vector<1x2x128xf32>
    %24 = vector.broadcast %23 : vector<1x2x128xf32> to vector<2x2x128xf32>
    %25 = arith.addf %22, %24 : vector<2x2x128xf32>
    %c0_5 = arith.constant 0 : index
    %c0_6 = arith.constant 0 : index
    %c0_7 = arith.constant 0 : index
    %26 = vector.load %arg3[%c0_5, %c0_6, %c0_7] : memref<2x2x128xf32, #tpu.memory_space<vmem>>, vector<2x2x128xf32>
    tpu.vector_store %arg3[%c0_5, %c0_6, %c0_7], %25 {strides = array<i32>} : memref<2x2x128xf32, #tpu.memory_space<vmem>>, vector<2x2x128xf32>,
    return
  }
  func.func @transform_0(%arg0: i32, %arg1: i32) -> (i32, i32, i32) {
    %c0_i32 = arith.constant 0 : i32
    %c0_i32_0 = arith.constant 0 : i32
    return %arg1, %arg0, %c0_i32 : i32, i32, i32
  }
  func.func @transform_1(%arg0: i32, %arg1: i32) -> (i32, i32, i32) {
    %c0_i32 = arith.constant 0 : i32
    %c0_i32_0 = arith.constant 0 : i32
    return %arg1, %arg0, %c0_i32 : i32, i32, i32
  }
}

</mosaic_0001>

<llo_original>
// kernel: binary_positional_encoding.1
$region0: #{binary_positional_encoding.1}
  #allocation0 [shape = 'u32[]', space=smem, size = 0x4, offset = 0x4, fixed_abs, tag = 'smem constant byte address 0x4 - core index']
  #allocation1 [shape = 'u32[144,128]{1,0:T(1,128)}', space=vmem, size = 0x12000, scoped, tag = 'internal scratch']
  %s0 = inlined_call_operand.vmem [shape: f32[2,2,128], index: 0, kind: input, shape index: {}]
  %s1 = inlined_call_operand.vmem [shape: f32[2,2,128], index: 1, kind: output, shape index: {}]
  %s2 = sld [smem:[#allocation0]]
  $region14: #{binary_positional_encoding.1} parent=0
    _
  %s4 = ssub.s32 1, %s2
  %s5 = scalar_select 0, %s4, %s2
  // Predicated region
  $region2: #{binary_positional_encoding.1} parent=0 // pred_check
    _
  $region3: #{binary_positional_encoding.1} parent=0 // pred_check_branch
    %7 = sbr.rel (0) target = $region5
  $region4: #{binary_positional_encoding.1} parent=0 // pred_region
    _
  $region5: #{binary_positional_encoding.1} parent=0 // pred_fallthru
    _
  %v8 = vlaneseq
  %v9 = vshrl.u32 %v8, 7
  %s10 = smul.u32 0, 2
  %v11 = vstv %s10
  %v12 = vadd.s32 %v9, %v11
  %v13 = vlaneseq
  %v14 = vand.u32 %v13, 127
  %v15 = vmul.u32 %v12, 128
  %v16 = vadd.s32 %v15, %v14
  %v17 = vshra.s32 %v16, 5
  %v18 = vand.u32 %v16, 31
  %vm19 = vcmp.lt.s32.totalorder %v18, 31
  %v20 = vsel %vm19, %v18, 31
  %v21 = vshra.s32 %v17, %v20
  %v22 = vand.u32 %v21, 1
  %v23 = vmul.u32 %v22, 2
  %v24 = vsub.s32 %v23, 1
  %v25 = vcvt.s32.f32 %v24
  %v26 = vld [vmem:[%s0] sm:$0x3]
  %v27 = vld [vmem:[%s0 + $0x2] sm:$0x3]
  %v28 = vadd.f32 %v26, %v25
  %v29 = vadd.f32 %v27, %v25
  %30 = vst [vmem:[%s1] sm:$0x3] %v28
  %31 = vst [vmem:[%s1 + $0x2] sm:$0x3] %v29
  // Predicated region
  $region6: #{binary_positional_encoding.1} parent=0 // pred_check
    _
  $region7: #{binary_positional_encoding.1} parent=0 // pred_check_branch
    %33 = sbr.rel (0) target = $region9
  $region8: #{binary_positional_encoding.1} parent=0 // pred_region
    _
  $region9: #{binary_positional_encoding.1} parent=0 // pred_fallthru
    _
  // Predicated region
  $region10: #{binary_positional_encoding.1} parent=0 // pred_check
    _
  $region11: #{binary_positional_encoding.1} parent=0 // pred_check_branch
    %35 = sbr.rel (0) target = $region13
  $region12: #{binary_positional_encoding.1} parent=0 // pred_region
    _
  $region13: #{binary_positional_encoding.1} parent=0 // pred_fallthru
    _

</llo_original>
